<compile_context>
chip_gen: v5e
topology: v5e:2x2
jax: 0.10.0
libtpu: 0.0.40
codegen_flags: <defaults>
</compile_context>

<pallas_src>
import functools

import jax
import jax.numpy as jnp
from jax import lax
from jax.experimental import pallas as pl
from jax.experimental.pallas import tpu as pltpu

LANE = 128
SUBLANE = 8

OUT_FEATURES = 2
BIAS_VALUE = 0.01


def _round_up(x, m):
    return (x + m - 1) // m * m


# ---------------------------------------------------------------------------
# Kernel: o = W_pad @ x_tile.T + bias     (single whole-K MXU matmul, NT form)
# Blocks: x (tm, K) ; w (Npad, K) ; out (Npad, tm)  -- lane-dense along M.
# ---------------------------------------------------------------------------
def _wxT_kernel(x_ref, wt_ref, o_ref, *, bias):
    o_ref[...] = (
        lax.dot_general(
            wt_ref[...], x_ref[...],
            dimension_numbers=(((1,), (1,)), ((), ())),
            preferred_element_type=jnp.float32,
        )
        + bias
    )


def _choose_tm(M, K, Npad, budget_bytes=40 << 20):
    """Rows of x per grid step: ~2 MiB x-tiles, VMEM- and megacore-aware."""
    if M <= LANE:
        return M  # single block; every block dim equals the full array dim
    tm = max(512, (2 << 20) // (4 * K))        # target ~2 MiB of x per step
    tm = _round_up(min(tm, 1 << 14), LANE)
    tm = min(tm, _round_up(M, LANE))           # never exceed the batch

    def fp(t):  # double-buffered x + w + out footprint
        return 2 * t * K * 4 + 2 * Npad * K * 4 + 2 * Npad * t * 4

    while tm > LANE and fp(tm) > budget_bytes:
        tm -= LANE
    # v7x megacore: with a big batch, keep >= 2 "parallel" grid steps
    if M > 2 * LANE:
        tm = min(tm, _round_up(pl.cdiv(M, 2), LANE))
    return max(tm, LANE)


def linear2(x, w, *, bias=BIAS_VALUE):
    """x: [M, K] f32, w: [N, K] f32 (PyTorch layout) -> [M, N] f32 = x @ w.T + bias."""
    M, K = x.shape
    N = w.shape[0]
    Npad = _round_up(N, SUBLANE)

    # Only the tiny weight gets padded (N -> 8 rows); x is consumed as-is.
    wp = jnp.zeros((Npad, K), w.dtype).at[:N, :].set(w)

    tm = _choose_tm(M, K, Npad)
    n_steps = pl.cdiv(M, tm)

    footprint = 2 * tm * K * 4 + 2 * Npad * K * 4 + 2 * Npad * tm * 4
    vmem_limit = int(min(max(footprint + (2 << 20), 16 << 20), 48 << 20))

    # TODO(synk): add a trailing "arbitrary" K grid axis + f32 VMEM accumulator
    # if input_size ever exceeds ~40k columns (whole-K block stops fitting VMEM).
    out_t = pl.pallas_call(
        functools.partial(_wxT_kernel, bias=float(bias)),
        out_shape=jax.ShapeDtypeStruct((Npad, M), jnp.float32),
        grid_spec=pltpu.PrefetchScalarGridSpec(
            num_scalar_prefetch=0,
            grid=(n_steps,),
            in_specs=[
                pl.BlockSpec((tm, K), lambda i: (i, 0)),     # x: tiled over M
                pl.BlockSpec((Npad, K), lambda i: (0, 0)),   # w: whole, resident
            ],
            out_specs=pl.BlockSpec((Npad, tm), lambda i: (0, i)),  # lane-dense M
        ),
        compiler_params=pltpu.CompilerParams(
            dimension_semantics=("parallel",),
            vmem_limit_bytes=vmem_limit,
        ),
    )(x, wp)

    # Trivial host-side fixup: (Npad, M) -> (M, N)
    return out_t[:N, :].T


# ---------------------------------------------------------------------------
# simpleSimilarity0L forward: re-init (xavier_uniform, bias=0.01), then Linear.
# Pass a fresh key per call to mirror PyTorch's advancing global RNG.
# ---------------------------------------------------------------------------
def simple_similarity_forward(x, init_key):
    """x: [batch, input_size] -> [batch, 2]."""
    M, K = x.shape
    # torch.nn.init.xavier_uniform_: bound = sqrt(6 / (fan_in + fan_out))
    limit = (6.0 / (K + OUT_FEATURES)) ** 0.5
    w = jax.random.uniform(init_key, (OUT_FEATURES, K), jnp.float32, -limit, limit)
    if M * K < 2048:
        # Tiny problem: fixed pallas_call cost dwarfs the work; plain XLA.
        return x @ w.T + BIAS_VALUE
    return linear2(x, w)


if __name__ == "__main__":
    key = jax.random.PRNGKey(0)
    k_init, k_x = jax.random.split(key)

    # Small, but big enough to exercise the Pallas path (2 ragged grid steps).
    batch, input_size = 300, 32
    x = jax.random.normal(k_x, (batch, input_size), jnp.float32)

    fwd = jax.jit(simple_similarity_forward)
    y = jax.block_until_ready(fwd(x, k_init))

    # pure-JAX reference with the same deterministic init
    limit = (6.0 / (input_size + OUT_FEATURES)) ** 0.5
    w_ref = jax.random.uniform(k_init, (OUT_FEATURES, input_size),
                               jnp.float32, -limit, limit)
    y_ref = x @ w_ref.T + BIAS_VALUE

    assert y.shape == (batch, OUT_FEATURES), y.shape
    assert bool(jnp.all(jnp.isfinite(y)))
    assert bool(jnp.allclose(y, y_ref, atol=1e-5, rtol=1e-5))
    print("KERNEL_OK")
</pallas_src>

<mosaic_0001>
module attributes {stable_mosaic.version = 11 : i64} {
  func.func @_wxT_kernel(%arg0: i32, %arg1: memref<256x32xf32, #tpu.memory_space<vmem>>, %arg2: memref<8x32xf32, #tpu.memory_space<vmem>>, %arg3: memref<8x256xf32, #tpu.memory_space<vmem>>) attributes {dimension_semantics = [#tpu.dimension_semantics<parallel>], iteration_bounds = array<i64: 2>, scalar_prefetch = 0 : i64, scratch_operands = 0 : i64, tpu.core_type = #tpu.core_type<tc>, window_params = [{transform_indices = @transform_0, window_bounds = array<i64: 256, 32>}, {pipeline_mode = #tpu.pipeline_mode<synchronous>, transform_indices = @transform_1, window_bounds = array<i64: 8, 32>}, {transform_indices = @transform_2, window_bounds = array<i64: 8, 256>}]} {
    %c0 = arith.constant 0 : index
    %c0_0 = arith.constant 0 : index
    %0 = vector.load %arg2[%c0, %c0_0] : memref<8x32xf32, #tpu.memory_space<vmem>>, vector<8x32xf32>
    %c0_1 = arith.constant 0 : index
    %c0_2 = arith.constant 0 : index
    %1 = vector.load %arg1[%c0_1, %c0_2] : memref<256x32xf32, #tpu.memory_space<vmem>>, vector<256x32xf32>
    %cst = arith.constant dense<0.000000e+00> : vector<8x256xf32>
    %2 = tpu.matmul %0, %1, %cst {dimension_numbers = #tpu.dot_dimension_numbers<[1], [1], [0], [0], [0, 0, 1, 0], [], []>} : vector<8x32xf32>, vector<256x32xf32>, vector<8x256xf32> -> vector<8x256xf32>
    %cst_3 = arith.constant 0.00999999977 : f32
    %3 = vector.broadcast %cst_3 : f32 to vector<8x256xf32>
    %4 = arith.addf %2, %3 : vector<8x256xf32>
    %c0_4 = arith.constant 0 : index
    %c0_5 = arith.constant 0 : index
    %5 = vector.load %arg3[%c0_4, %c0_5] : memref<8x256xf32, #tpu.memory_space<vmem>>, vector<8x256xf32>
    tpu.vector_store %arg3[%c0_4, %c0_5], %4 {strides = array<i32>} : memref<8x256xf32, #tpu.memory_space<vmem>>, vector<8x256xf32>,
    return
  }
  func.func @transform_0(%arg0: i32) -> (i32, i32) {
    %c0_i32 = arith.constant 0 : i32
    %c0_i32_0 = arith.constant 0 : i32
    return %arg0, %c0_i32 : i32, i32
  }
  func.func @transform_1(%arg0: i32) -> (i32, i32) {
    %c0_i32 = arith.constant 0 : i32
    %c0_i32_0 = arith.constant 0 : i32
    %c0_i32_1 = arith.constant 0 : i32
    return %c0_i32, %c0_i32_0 : i32, i32
  }
  func.func @transform_2(%arg0: i32) -> (i32, i32) {
    %c0_i32 = arith.constant 0 : i32
    %c0_i32_0 = arith.constant 0 : i32
    return %c0_i32, %arg0 : i32, i32
  }
}

</mosaic_0001>

<llo_original>
// kernel: simple_similarity_forward.1
$region0: #{simple_similarity_forward.1}
  #allocation0 [shape = 'u32[]', space=smem, size = 0x4, offset = 0x4, fixed_abs, tag = 'smem constant byte address 0x4 - core index']
  #allocation1 [shape = 'u32[72,128]{1,0:T(1,128)}', space=vmem, size = 0x9000, scoped, tag = 'internal scratch']
  %s0 = inlined_call_operand.vmem [shape: f32[300,32], index: 0, kind: input, shape index: {}]
  %s1 = inlined_call_operand.vmem [shape: f32[8,32], index: 1, kind: input, shape index: {}]
  %s2 = inlined_call_operand.vmem [shape: f32[8,300], index: 2, kind: output, shape index: {}]
  %s3 = sld [smem:[#allocation0]]
  $region103: #{simple_similarity_forward.1} parent=0
    _
  %s5 = ssub.s32 1, %s3
  %s6 = scalar_select 0, %s5, %s3
  $region1: #{simple_similarity_forward.1} parent=0
    #allocation2 [shape = 'u8[16384]{0}', space=vmem, size = 0x4000, scoped, tag = 'output window, operand 0']
    loop: start=0, step=1, limit=4
    $region2: #{simple_similarity_forward.1} parent=1 // loop_pre_header
      _
    $region3: #{simple_similarity_forward.1} parent=1 // loop_header
      %s8 = sphi 0, %s12
      %p9 = scmp.ge.s32.totalorder %s8, 4
      %s18 = sphi 0, %s20
      %s21 = sphi 0, %s18
      %s22 = sphi 0, %s21
      %s38 = sphi 0, %s22
      %s42 = sphi 0, %s42
      %s44 = sphi 0, %s42
      %s45 = sphi 0, %s44
      %s59 = sphi 0, %s45
      %s65 = sphi 0, %s67
      %s68 = sphi 0, %s65
      %s69 = sphi 0, %s68
      %s85 = sphi 0, %s69
    $region4: #{simple_similarity_forward.1} parent=1 // loop_header_branch
      %11 = sbr.rel (%p9) target = $region8
    $region5: #{simple_similarity_forward.1} parent=1 // loop_body
      %s13 = ssub.s32 %s8, 1
      %s14 = ssub.s32 %s8, 2
      %s15 = sadd.s32 %s8, 1
      %s16 = ssub.s32 %s8, %s15
      %p17 = scmp.eq.s32.totalorder %s16, 0
      %s19 = sadd.s32 %s18, 1
      %s20 = scalar_select %p17, %s18, %s19
      %p23 = pneg %p17
      %p24 = scmp.eq.s32.totalorder %s8, 1
      %p25 = por %p23, %p24
      %p26 = scmp.ne.s32.totalorder %s18, %s21
      %p27 = scmp.eq.s32.totalorder %s8, 0
      %p28 = por %p26, %p27
      %p29 = scmp.ne.s32.totalorder %s18, %s21
      %p30 = scmp.eq.s32.totalorder %s13, 1
      %p31 = por %p29, %p30
      %p32 = scmp.ne.s32.totalorder %s21, %s22
      %p33 = scmp.eq.s32.totalorder %s13, 0
      %p34 = por %p32, %p33
      %p35 = scmp.ne.s32.totalorder %s21, %s22
      %p36 = scmp.eq.s32.totalorder %s14, 1
      %p37 = por %p35, %p36
      %p39 = scmp.ne.s32.totalorder %s22, %s38
      %p40 = scmp.eq.s32.totalorder %s14, 0
      %p41 = por %p39, %p40
      %s43 = sadd.s32 %s42, 1
      %p46 = scmp.eq.s32.totalorder %s8, 1
      %p47 = scmp.ne.s32.totalorder %s42, %s44
      %p48 = scmp.eq.s32.totalorder %s8, 0
      %p49 = por %p47, %p48
      %p50 = scmp.ne.s32.totalorder %s42, %s44
      %p51 = scmp.eq.s32.totalorder %s13, 1
      %p52 = por %p50, %p51
      %p53 = scmp.ne.s32.totalorder %s44, %s45
      %p54 = scmp.eq.s32.totalorder %s13, 0
      %p55 = por %p53, %p54
      %p56 = scmp.ne.s32.totalorder %s44, %s45
      %p57 = scmp.eq.s32.totalorder %s14, 1
      %p58 = por %p56, %p57
      %p60 = scmp.ne.s32.totalorder %s45, %s59
      %p61 = scmp.eq.s32.totalorder %s14, 0
      %p62 = por %p60, %p61
      %s63 = ssub.s32 %s8, %s15
      %p64 = scmp.eq.s32.totalorder %s63, 0
      %s66 = sadd.s32 %s65, 1
      %s67 = scalar_select %p64, %s65, %s66
      %p70 = pneg %p64
      %p71 = scmp.eq.s32.totalorder %s8, 1
      %p72 = por %p70, %p71
      %p73 = scmp.ne.s32.totalorder %s65, %s68
      %p74 = scmp.eq.s32.totalorder %s8, 0
      %p75 = por %p73, %p74
      %p76 = scmp.ne.s32.totalorder %s65, %s68
      %p77 = scmp.eq.s32.totalorder %s13, 1
      %p78 = por %p76, %p77
      %p79 = scmp.ne.s32.totalorder %s68, %s69
      %p80 = scmp.eq.s32.totalorder %s13, 0
      %p81 = por %p79, %p80
      %p82 = scmp.ne.s32.totalorder %s68, %s69
      %p83 = scmp.eq.s32.totalorder %s14, 1
      %p84 = por %p82, %p83
      %p86 = scmp.ne.s32.totalorder %s69, %s85
      %p87 = scmp.eq.s32.totalorder %s14, 0
      %p88 = por %p86, %p87
      %p89 = scmp.le.s32.totalorder 1, %s8
      %p90 = scmp.lt.s32.totalorder %s8, 3
      %p91 = pnand %p89, %p90
      %p92 = pneg %p91
      // Predicated region
      $region9: #{simple_similarity_forward.1} parent=5 // pred_check
        _
      $region10: #{simple_similarity_forward.1} parent=5 // pred_check_branch
        %94 = sbr.rel (%p91) target = $region12
      $region11: #{simple_similarity_forward.1} parent=5 // pred_region
        %s95 = ssub.s32 %s8, 1
        // Predicated region
        $region13: #{simple_similarity_forward.1} parent=11 // pred_check
          %p96 = pneg %p55
        $region14: #{simple_similarity_forward.1} parent=11 // pred_check_branch
          %98 = sbr.rel (%p96) target = $region16
        $region15: #{simple_similarity_forward.1} parent=11 // pred_region
          _
        $region16: #{simple_similarity_forward.1} parent=11 // pred_fallthru
          _
      $region12: #{simple_similarity_forward.1} parent=5 // pred_fallthru
        _
      %p99 = scmp.lt.s32.totalorder %s8, 2
      // Predicated region
      $region17: #{simple_similarity_forward.1} parent=5 // pred_check
        %p100 = pneg %p99
      $region18: #{simple_similarity_forward.1} parent=5 // pred_check_branch
        %102 = sbr.rel (%p100) target = $region20
      $region19: #{simple_similarity_forward.1} parent=5 // pred_region
        // Predicated region
        $region21: #{simple_similarity_forward.1} parent=19 // pred_check
          %p103 = pneg %p28
        $region22: #{simple_similarity_forward.1} parent=19 // pred_check_branch
          %105 = sbr.rel (%p103) target = $region24
        $region23: #{simple_similarity_forward.1} parent=19 // pred_region
          %s106 = smul.u32 32, %s8
          %s107 = ssub.s32 38, %s106
          %p108 = scmp.lt.s32.totalorder %s107, 32
          %s109 = scalar_select %p108, %s107, 32
          %s110 = smul.u32 8, %s109
          %p111 = scmp.lt.s32.totalorder %s106, 37
          %s112 = scalar_select %p111, %s106, 37
          %s113 = smul.addr %s112, 8
          %s114 = scalar_lea.vmem %s0, %s113
          %s115 = smul.u32 32, %s8
          %s116 = ssub.s32 38, %s115
          %p117 = scmp.lt.s32.totalorder %s116, 32
          %s118 = scalar_select %p117, %s116, 32
          %s119 = smul.u32 8, %s118
        $region24: #{simple_similarity_forward.1} parent=19 // pred_fallthru
          _
      $region20: #{simple_similarity_forward.1} parent=5 // pred_fallthru
        _
      %p120 = scmp.le.s32.totalorder 1, %s8
      %p121 = scmp.lt.s32.totalorder %s8, 3
      %p122 = pnand %p120, %p121
      %p123 = pneg %p122
      // Predicated region
      $region25: #{simple_similarity_forward.1} parent=5 // pred_check
        _
      $region26: #{simple_similarity_forward.1} parent=5 // pred_check_branch
        %125 = sbr.rel (%p122) target = $region28
      $region27: #{simple_similarity_forward.1} parent=5 // pred_region
        %s126 = ssub.s32 %s8, 1
        %s127 = smul.u32 32, %s13
        %s128 = ssub.s32 38, %s127
        %p129 = scmp.lt.s32.totalorder %s128, 32
        %s130 = scalar_select %p129, %s128, 32
        %s131 = smul.u32 8, %s130
        %p132 = scmp.lt.s32.totalorder %s127, 37
        %s133 = scalar_select %p132, %s127, 37
        %s134 = smul.addr %s133, 8
        %s135 = scalar_lea.vmem %s0, %s134
        %p136 = pneg %p34
        %p137 = pneg %p31
        %p138 = pneg %p55
        %p139 = pneg %p52
        %p140 = pneg %p81
        %p141 = pneg %p78
        %s142 = sand.u32 %s68, 1
        %s143 = sand.u32 %s68, 1
        %s144 = smul.addr %s143, 16
        %s145 = scalar_lea.vmem [#allocation2], %s144
        %s146 = smul.u32 32, %s13
        %s147 = ssub.s32 38, %s146
        %p148 = scmp.lt.s32.totalorder %s147, 32
        %s149 = scalar_select %p148, %s147, 32
        %s150 = smul.u32 8, %s149
        %p151 = scmp.lt.s32.totalorder %s146, 37
        %s152 = scalar_select %p151, %s146, 37
        %s153 = smul.addr %s152, 8
        %s154 = scalar_lea.vmem %s0, %s153
        %s155 = smul.u32 32, %s13
        %s156 = ssub.s32 38, %s155
        %p157 = scmp.lt.s32.totalorder %s156, 32
        %s158 = scalar_select %p157, %s156, 32
        %s159 = smul.u32 8, %s158
        %s160 = smul.u32 2, %s13
        %s161 = ssub.s32 3, %s160
        %p162 = scmp.lt.s32.totalorder %s161, 2
        %s163 = scalar_select %p162, %s161, 2
        %s164 = smul.u32 8, %s163
        %v165 = vld [vmem:[%s1] sm:$0xff]
        %v166 = vld [vmem:[%s154] sm:$0xff]
        %v167 = vld [vmem:[%s154 + $0x8] sm:$0xff]
        %v168 = vld [vmem:[%s154 + $0x10] sm:$0xff]
        %v169 = vld [vmem:[%s154 + $0x18] sm:$0xff]
        %v170 = vld [vmem:[%s154 + $0x20] sm:$0xff]
        %v171 = vld [vmem:[%s154 + $0x28] sm:$0xff]
        %v172 = vld [vmem:[%s154 + $0x30] sm:$0xff]
        %v173 = vld [vmem:[%s154 + $0x38] sm:$0xff]
        %v174 = vld [vmem:[%s154 + $0x40] sm:$0xff]
        %v175 = vld [vmem:[%s154 + $0x48] sm:$0xff]
        %v176 = vld [vmem:[%s154 + $0x50] sm:$0xff]
        %v177 = vld [vmem:[%s154 + $0x58] sm:$0xff]
        %v178 = vld [vmem:[%s154 + $0x60] sm:$0xff]
        %v179 = vld [vmem:[%s154 + $0x68] sm:$0xff]
        %v180 = vld [vmem:[%s154 + $0x70] sm:$0xff]
        %v181 = vld [vmem:[%s154 + $0x78] sm:$0xff]
        %v182 = vld [vmem:[%s154 + $0x80] sm:$0xff]
        %v183 = vld [vmem:[%s154 + $0x88] sm:$0xff]
        %v184 = vld [vmem:[%s154 + $0x90] sm:$0xff]
        %v185 = vld [vmem:[%s154 + $0x98] sm:$0xff]
        %v186 = vld [vmem:[%s154 + $0xa0] sm:$0xff]
        %v187 = vld [vmem:[%s154 + $0xa8] sm:$0xff]
        %v188 = vld [vmem:[%s154 + $0xb0] sm:$0xff]
        %v189 = vld [vmem:[%s154 + $0xb8] sm:$0xff]
        %v190 = vld [vmem:[%s154 + $0xc0] sm:$0xff]
        %v191 = vld [vmem:[%s154 + $0xc8] sm:$0xff]
        %v192 = vld [vmem:[%s154 + $0xd0] sm:$0xff]
        %v193 = vld [vmem:[%s154 + $0xd8] sm:$0xff]
        %v194 = vld [vmem:[%s154 + $0xe0] sm:$0xff]
        %v195 = vld [vmem:[%s154 + $0xe8] sm:$0xff]
        %v196 = vld [vmem:[%s154 + $0xf0] sm:$0xff]
        %v197 = vld [vmem:[%s154 + $0xf8] sm:$0xff]
        %vm198 = vcmask 261120
        %v200 = vsel %vm198, %v165, 0
        %v203 = vsel %vm198, %v166, 0
        %v206 = vsel %vm198, %v167, 0
        %v209 = vsel %vm198, %v168, 0
        %v212 = vsel %vm198, %v169, 0
        %v215 = vsel %vm198, %v170, 0
        %v218 = vsel %vm198, %v171, 0
        %v221 = vsel %vm198, %v172, 0
        %v224 = vsel %vm198, %v173, 0
        %v227 = vsel %vm198, %v174, 0
        %v230 = vsel %vm198, %v175, 0
        %v233 = vsel %vm198, %v176, 0
        %v236 = vsel %vm198, %v177, 0
        %v239 = vsel %vm198, %v178, 0
        %v242 = vsel %vm198, %v179, 0
        %v245 = vsel %vm198, %v180, 0
        %v248 = vsel %vm198, %v181, 0
        %v251 = vsel %vm198, %v182, 0
        %v254 = vsel %vm198, %v183, 0
        %v257 = vsel %vm198, %v184, 0
        %v260 = vsel %vm198, %v185, 0
        %v263 = vsel %vm198, %v186, 0
        %v266 = vsel %vm198, %v187, 0
        %v269 = vsel %vm198, %v188, 0
        %v272 = vsel %vm198, %v189, 0
        %v275 = vsel %vm198, %v190, 0
        %v278 = vsel %vm198, %v191, 0
        %v281 = vsel %vm198, %v192, 0
        %v284 = vsel %vm198, %v193, 0
        %v287 = vsel %vm198, %v194, 0
        %v290 = vsel %vm198, %v195, 0
        %v293 = vsel %vm198, %v196, 0
        %v296 = vsel %vm198, %v197, 0
        %298 = vmatpush.xpose.msra.mxu0 %v248
        %299 = vmatpush.xpose.msra.mxu0 %v245
        %300 = vmatpush.xpose.msra.mxu0 %v242
        %301 = vmatpush.xpose.msra.mxu0 %v239
        %302 = vmatpush.xpose.msra.mxu0 %v236
        %303 = vmatpush.xpose.msra.mxu0 %v233
        %304 = vmatpush.xpose.msra.mxu0 %v230
        %305 = vmatpush.xpose.msra.mxu0 %v227
        %306 = vmatpush.xpose.msra.mxu0 %v224
        %307 = vmatpush.xpose.msra.mxu0 %v221
        %308 = vmatpush.xpose.msra.mxu0 %v218
        %309 = vmatpush.xpose.msra.mxu0 %v215
        %310 = vmatpush.xpose.msra.mxu0 %v212
        %311 = vmatpush.xpose.msra.mxu0 %v209
        %312 = vmatpush.xpose.msra.mxu0 %v206
        %313 = vmatpush.xpose.msra.mxu0 %v203
        %314 = vmatmul.f32.gmra.mxu0 %v200
        %v315 = vpop.f32.mrf.mxu0
        %v316 = vadd.f32 0.01, %v315
        %317 = vdwg.mxu0
        %318 = vmatpush.xpose.msra.mxu0 %v296
        %319 = vmatpush.xpose.msra.mxu0 %v293
        %320 = vmatpush.xpose.msra.mxu0 %v290
        %321 = vmatpush.xpose.msra.mxu0 %v287
        %322 = vmatpush.xpose.msra.mxu0 %v284
        %323 = vmatpush.xpose.msra.mxu0 %v281
        %324 = vmatpush.xpose.msra.mxu0 %v278
        %325 = vmatpush.xpose.msra.mxu0 %v275
        %326 = vmatpush.xpose.msra.mxu0 %v272
        %327 = vmatpush.xpose.msra.mxu0 %v269
        %328 = vmatpush.xpose.msra.mxu0 %v266
        %329 = vmatpush.xpose.msra.mxu0 %v263
        %330 = vmatpush.xpose.msra.mxu0 %v260
        %331 = vmatpush.xpose.msra.mxu0 %v257
        %332 = vmatpush.xpose.msra.mxu0 %v254
        %333 = vmatpush.xpose.msra.mxu0 %v251
        %334 = vmatmul.f32.gmra.mxu0 %v200
        %v335 = vpop.f32.mrf.mxu0
        %v336 = vadd.f32 0.01, %v335
        %337 = vdwg.mxu0
        %338 = vst [vmem:[%s145] sm:$0xff] %v316
        %339 = vst [vmem:[%s145 + $0x8] sm:$0xff] %v336
        %s340 = sand.u32 %s68, 1
        %s341 = sand.u32 %s68, 1
        %s342 = smul.addr %s341, 16
        %s343 = scalar_lea.vmem [#allocation2], %s342
        // Predicated region
        $region29: #{simple_similarity_forward.1} parent=27 // pred_check
          %p344 = pneg %p78
        $region30: #{simple_similarity_forward.1} parent=27 // pred_check_branch
          %346 = sbr.rel (%p344) target = $region32
        $region31: #{simple_similarity_forward.1} parent=27 // pred_region
          %s347 = smul.u32 2, %s13
          %s348 = ssub.s32 3, %s347
          %p349 = scmp.lt.s32.totalorder %s348, 2
          %s350 = scalar_select %p349, %s348, 2
          %s351 = smul.u32 8, %s350
          %p352 = scmp.ne.s32.totalorder 0, %s351
          %s353 = smul.addr %s347, 8
          %s354 = scalar_lea.vmem %s2, %s353
          %s355 = smul.u32 %s350, 8
          // Predicated region
          $region33: #{simple_similarity_forward.1} parent=31 // pred_check
            %p356 = pneg %p352
          $region34: #{simple_similarity_forward.1} parent=31 // pred_check_branch
            %358 = sbr.rel (%p356) target = $region36
          $region35: #{simple_similarity_forward.1} parent=31 // pred_region
            %p359 = scmp.lt.u32.totalorder %s355, 8
            %p360 = pneg %p359
            // Predicated region
            $region37: #{simple_similarity_forward.1} parent=35 // pred_check
              _
            $region38: #{simple_similarity_forward.1} parent=35 // pred_check_branch
              %362 = sbr.rel (%p359) target = $region40
            $region39: #{simple_similarity_forward.1} parent=35 // pred_region
              %s378 = sand.u32 %s355, 7
              %p379 = scmp.eq.s32.totalorder %s378, 0
              // Predicated region
              $region52: #{simple_similarity_forward.1} parent=39 // pred_check
                %p380 = pneg %p379
              $region53: #{simple_similarity_forward.1} parent=39 // pred_check_branch
                %382 = sbr.rel (%p380) target = $region55
              $region54: #{simple_similarity_forward.1} parent=39 // pred_region
                %s383 = sshrl.u32 %s355, 3
                %s384 = sshrl.u32 %s383, 5
                // While loop
                $region56: #{simple_similarity_forward.1} parent=54 // loop_pre_header
                  _
                $region57: #{simple_similarity_forward.1} parent=54 // loop_header
                  %s386 = sphi 0, %s388
                  %p387 = scmp.ge.s32.totalorder %s386, %s384
                  %s391 = sphi 0, %s460
                  %s392 = sphi %s343, %s463
                  %s393 = sphi %s354, %s464
                $region58: #{simple_similarity_forward.1} parent=54 // loop_header_branch
                  %390 = sbr.rel (%p387) target = $region62
                $region59: #{simple_similarity_forward.1} parent=54 // loop_body
                  %v394 = vld [vmem:[%s392] sm:$0xff]
                  %395 = vst [vmem:[%s393] sm:$0xff] %v394
                  %v396 = vld [vmem:[%s392 + $0x8] sm:$0xff]
                  %397 = vst [vmem:[%s393 + $0x8] sm:$0xff] %v396
                  %v398 = vld [vmem:[%s392 + $0x10] sm:$0xff]
                  %399 = vst [vmem:[%s393 + $0x10] sm:$0xff] %v398
                  %v400 = vld [vmem:[%s392 + $0x18] sm:$0xff]
                  %401 = vst [vmem:[%s393 + $0x18] sm:$0xff] %v400
                  %v402 = vld [vmem:[%s392 + $0x20] sm:$0xff]
                  %403 = vst [vmem:[%s393 + $0x20] sm:$0xff] %v402
                  %v404 = vld [vmem:[%s392 + $0x28] sm:$0xff]
                  %405 = vst [vmem:[%s393 + $0x28] sm:$0xff] %v404
                  %v406 = vld [vmem:[%s392 + $0x30] sm:$0xff]
                  %407 = vst [vmem:[%s393 + $0x30] sm:$0xff] %v406
                  %v408 = vld [vmem:[%s392 + $0x38] sm:$0xff]
                  %409 = vst [vmem:[%s393 + $0x38] sm:$0xff] %v408
                  %v410 = vld [vmem:[%s392 + $0x40] sm:$0xff]
                  %411 = vst [vmem:[%s393 + $0x40] sm:$0xff] %v410
                  %v412 = vld [vmem:[%s392 + $0x48] sm:$0xff]
                  %413 = vst [vmem:[%s393 + $0x48] sm:$0xff] %v412
                  %v414 = vld [vmem:[%s392 + $0x50] sm:$0xff]
                  %415 = vst [vmem:[%s393 + $0x50] sm:$0xff] %v414
                  %v416 = vld [vmem:[%s392 + $0x58] sm:$0xff]
                  %417 = vst [vmem:[%s393 + $0x58] sm:$0xff] %v416
                  %v418 = vld [vmem:[%s392 + $0x60] sm:$0xff]
                  %419 = vst [vmem:[%s393 + $0x60] sm:$0xff] %v418
                  %v420 = vld [vmem:[%s392 + $0x68] sm:$0xff]
                  %421 = vst [vmem:[%s393 + $0x68] sm:$0xff] %v420
                  %v422 = vld [vmem:[%s392 + $0x70] sm:$0xff]
                  %423 = vst [vmem:[%s393 + $0x70] sm:$0xff] %v422
                  %v424 = vld [vmem:[%s392 + $0x78] sm:$0xff]
                  %425 = vst [vmem:[%s393 + $0x78] sm:$0xff] %v424
                  %v426 = vld [vmem:[%s392 + $0x80] sm:$0xff]
                  %427 = vst [vmem:[%s393 + $0x80] sm:$0xff] %v426
                  %v428 = vld [vmem:[%s392 + $0x88] sm:$0xff]
                  %429 = vst [vmem:[%s393 + $0x88] sm:$0xff] %v428
                  %v430 = vld [vmem:[%s392 + $0x90] sm:$0xff]
                  %431 = vst [vmem:[%s393 + $0x90] sm:$0xff] %v430
                  %v432 = vld [vmem:[%s392 + $0x98] sm:$0xff]
                  %433 = vst [vmem:[%s393 + $0x98] sm:$0xff] %v432
                  %v434 = vld [vmem:[%s392 + $0xa0] sm:$0xff]
                  %435 = vst [vmem:[%s393 + $0xa0] sm:$0xff] %v434
                  %v436 = vld [vmem:[%s392 + $0xa8] sm:$0xff]
                  %437 = vst [vmem:[%s393 + $0xa8] sm:$0xff] %v436
                  %v438 = vld [vmem:[%s392 + $0xb0] sm:$0xff]
                  %439 = vst [vmem:[%s393 + $0xb0] sm:$0xff] %v438
                  %v440 = vld [vmem:[%s392 + $0xb8] sm:$0xff]
                  %441 = vst [vmem:[%s393 + $0xb8] sm:$0xff] %v440
                  %v442 = vld [vmem:[%s392 + $0xc0] sm:$0xff]
                  %443 = vst [vmem:[%s393 + $0xc0] sm:$0xff] %v442
                  %v444 = vld [vmem:[%s392 + $0xc8] sm:$0xff]
                  %445 = vst [vmem:[%s393 + $0xc8] sm:$0xff] %v444
                  %v446 = vld [vmem:[%s392 + $0xd0] sm:$0xff]
                  %447 = vst [vmem:[%s393 + $0xd0] sm:$0xff] %v446
                  %v448 = vld [vmem:[%s392 + $0xd8] sm:$0xff]
                  %449 = vst [vmem:[%s393 + $0xd8] sm:$0xff] %v448
                  %v450 = vld [vmem:[%s392 + $0xe0] sm:$0xff]
                  %451 = vst [vmem:[%s393 + $0xe0] sm:$0xff] %v450
                  %v452 = vld [vmem:[%s392 + $0xe8] sm:$0xff]
                  %453 = vst [vmem:[%s393 + $0xe8] sm:$0xff] %v452
                  %v454 = vld [vmem:[%s392 + $0xf0] sm:$0xff]
                  %455 = vst [vmem:[%s393 + $0xf0] sm:$0xff] %v454
                  %v456 = vld [vmem:[%s392 + $0xf8] sm:$0xff]
                  %457 = vst [vmem:[%s393 + $0xf8] sm:$0xff] %v456
                  %s458 = sadd.s32 1, %s391
                  %p459 = scmp.ge.s32.totalorder %s458, %s384
                  %s460 = scalar_select %p459, 0, %s458
                  %s461 = smul.u32 %s460, 256
                  %s462 = smul.u32 %s460, 256
                  %s463 = scalar_lea.vmem %s343, %s461 [#allocation2]
                  %s464 = scalar_lea.vmem %s354, %s462
                $region60: #{simple_similarity_forward.1} parent=54 // loop_footer
                  %s388 = sadd.s32 %s386, 1
                $region61: #{simple_similarity_forward.1} parent=54 // loop_footer_branch
                  %385 = sbr.rel target = $region57
                $region62: #{simple_similarity_forward.1} parent=54 // loop_exit
                  _
                %s465 = sshrl.u32 %s383, 5
                %s466 = sand.u32 %s383, 31
                %s467 = smul.u32 %s465, 32
                %s468 = smul.u32 8, %s467
                %s469 = scalar_lea.vmem %s343, %s468 [#allocation2]
                %s470 = smul.u32 8, %s467
                %s471 = scalar_lea.vmem %s354, %s470
                // While loop
                $region63: #{simple_similarity_forward.1} parent=54 // loop_pre_header
                  _
                $region64: #{simple_similarity_forward.1} parent=54 // loop_header
                  %s473 = sphi 0, %s475
                  %p474 = scmp.ge.s32.totalorder %s473, %s466
                  %s478 = sphi 0, %s485
                  %s479 = sphi %s469, %s488
                  %s480 = sphi %s471, %s489
                $region65: #{simple_similarity_forward.1} parent=54 // loop_header_branch
                  %477 = sbr.rel (%p474) target = $region69
                $region66: #{simple_similarity_forward.1} parent=54 // loop_body
                  %v481 = vld [vmem:[%s479] sm:$0xff]
                  %482 = vst [vmem:[%s480] sm:$0xff] %v481
                  %s483 = sadd.s32 1, %s478
                  %p484 = scmp.ge.s32.totalorder %s483, %s466
                  %s485 = scalar_select %p484, 0, %s483
                  %s486 = smul.u32 %s485, 8
                  %s487 = smul.u32 %s485, 8
                  %s488 = scalar_lea.vmem %s469, %s486 [#allocation2]
                  %s489 = scalar_lea.vmem %s471, %s487
                $region67: #{simple_similarity_forward.1} parent=54 // loop_footer
                  %s475 = sadd.s32 %s473, 1
                $region68: #{simple_similarity_forward.1} parent=54 // loop_footer_branch
                  %472 = sbr.rel target = $region64
                $region69: #{simple_similarity_forward.1} parent=54 // loop_exit
                  _
              $region55: #{simple_similarity_forward.1} parent=39 // pred_fallthru
                _
              %p490 = pneg %p379
              // Predicated region
              $region70: #{simple_similarity_forward.1} parent=39 // pred_check
                _
              $region71: #{simple_similarity_forward.1} parent=39 // pred_check_branch
                %492 = sbr.rel (%p379) target = $region73
              $region72: #{simple_similarity_forward.1} parent=39 // pred_region
                %s493 = sand.u32 %s355, 7
                %s494 = ssub.s32 %s355, %s493
                %s495 = scalar_lea.vmem %s343, %s494 [#allocation2]
                %s496 = ssub.s32 %s355, %s493
                %s497 = scalar_lea.vmem %s354, %s496
                %s498 = sshrl.u32 %s355, 3
                %s499 = sshrl.u32 %s498, 5
                // While loop
                $region74: #{simple_similarity_forward.1} parent=72 // loop_pre_header
                  _
                $region75: #{simple_similarity_forward.1} parent=72 // loop_header
                  %s501 = sphi 0, %s503
                  %p502 = scmp.ge.s32.totalorder %s501, %s499
                  %s506 = sphi 0, %s575
                  %s507 = sphi %s343, %s578
                  %s508 = sphi %s354, %s579
                $region76: #{simple_similarity_forward.1} parent=72 // loop_header_branch
                  %505 = sbr.rel (%p502) target = $region80
                $region77: #{simple_similarity_forward.1} parent=72 // loop_body
                  %v509 = vld [vmem:[%s507] sm:$0xff]
                  %510 = vst [vmem:[%s508] sm:$0xff] %v509
                  %v511 = vld [vmem:[%s507 + $0x8] sm:$0xff]
                  %512 = vst [vmem:[%s508 + $0x8] sm:$0xff] %v511
                  %v513 = vld [vmem:[%s507 + $0x10] sm:$0xff]
                  %514 = vst [vmem:[%s508 + $0x10] sm:$0xff] %v513
                  %v515 = vld [vmem:[%s507 + $0x18] sm:$0xff]
                  %516 = vst [vmem:[%s508 + $0x18] sm:$0xff] %v515
                  %v517 = vld [vmem:[%s507 + $0x20] sm:$0xff]
                  %518 = vst [vmem:[%s508 + $0x20] sm:$0xff] %v517
                  %v519 = vld [vmem:[%s507 + $0x28] sm:$0xff]
                  %520 = vst [vmem:[%s508 + $0x28] sm:$0xff] %v519
                  %v521 = vld [vmem:[%s507 + $0x30] sm:$0xff]
                  %522 = vst [vmem:[%s508 + $0x30] sm:$0xff] %v521
                  %v523 = vld [vmem:[%s507 + $0x38] sm:$0xff]
                  %524 = vst [vmem:[%s508 + $0x38] sm:$0xff] %v523
                  %v525 = vld [vmem:[%s507 + $0x40] sm:$0xff]
                  %526 = vst [vmem:[%s508 + $0x40] sm:$0xff] %v525
                  %v527 = vld [vmem:[%s507 + $0x48] sm:$0xff]
                  %528 = vst [vmem:[%s508 + $0x48] sm:$0xff] %v527
                  %v529 = vld [vmem:[%s507 + $0x50] sm:$0xff]
                  %530 = vst [vmem:[%s508 + $0x50] sm:$0xff] %v529
                  %v531 = vld [vmem:[%s507 + $0x58] sm:$0xff]
                  %532 = vst [vmem:[%s508 + $0x58] sm:$0xff] %v531
                  %v533 = vld [vmem:[%s507 + $0x60] sm:$0xff]
                  %534 = vst [vmem:[%s508 + $0x60] sm:$0xff] %v533
                  %v535 = vld [vmem:[%s507 + $0x68] sm:$0xff]
                  %536 = vst [vmem:[%s508 + $0x68] sm:$0xff] %v535
                  %v537 = vld [vmem:[%s507 + $0x70] sm:$0xff]
                  %538 = vst [vmem:[%s508 + $0x70] sm:$0xff] %v537
                  %v539 = vld [vmem:[%s507 + $0x78] sm:$0xff]
                  %540 = vst [vmem:[%s508 + $0x78] sm:$0xff] %v539
                  %v541 = vld [vmem:[%s507 + $0x80] sm:$0xff]
                  %542 = vst [vmem:[%s508 + $0x80] sm:$0xff] %v541
                  %v543 = vld [vmem:[%s507 + $0x88] sm:$0xff]
                  %544 = vst [vmem:[%s508 + $0x88] sm:$0xff] %v543
                  %v545 = vld [vmem:[%s507 + $0x90] sm:$0xff]
                  %546 = vst [vmem:[%s508 + $0x90] sm:$0xff] %v545
                  %v547 = vld [vmem:[%s507 + $0x98] sm:$0xff]
                  %548 = vst [vmem:[%s508 + $0x98] sm:$0xff] %v547
                  %v549 = vld [vmem:[%s507 + $0xa0] sm:$0xff]
                  %550 = vst [vmem:[%s508 + $0xa0] sm:$0xff] %v549
                  %v551 = vld [vmem:[%s507 + $0xa8] sm:$0xff]
                  %552 = vst [vmem:[%s508 + $0xa8] sm:$0xff] %v551
                  %v553 = vld [vmem:[%s507 + $0xb0] sm:$0xff]
                  %554 = vst [vmem:[%s508 + $0xb0] sm:$0xff] %v553
                  %v555 = vld [vmem:[%s507 + $0xb8] sm:$0xff]
                  %556 = vst [vmem:[%s508 + $0xb8] sm:$0xff] %v555
                  %v557 = vld [vmem:[%s507 + $0xc0] sm:$0xff]
                  %558 = vst [vmem:[%s508 + $0xc0] sm:$0xff] %v557
                  %v559 = vld [vmem:[%s507 + $0xc8] sm:$0xff]
                  %560 = vst [vmem:[%s508 + $0xc8] sm:$0xff] %v559
                  %v561 = vld [vmem:[%s507 + $0xd0] sm:$0xff]
                  %562 = vst [vmem:[%s508 + $0xd0] sm:$0xff] %v561
                  %v563 = vld [vmem:[%s507 + $0xd8] sm:$0xff]
                  %564 = vst [vmem:[%s508 + $0xd8] sm:$0xff] %v563
                  %v565 = vld [vmem:[%s507 + $0xe0] sm:$0xff]
                  %566 = vst [vmem:[%s508 + $0xe0] sm:$0xff] %v565
                  %v567 = vld [vmem:[%s507 + $0xe8] sm:$0xff]
                  %568 = vst [vmem:[%s508 + $0xe8] sm:$0xff] %v567
                  %v569 = vld [vmem:[%s507 + $0xf0] sm:$0xff]
                  %570 = vst [vmem:[%s508 + $0xf0] sm:$0xff] %v569
                  %v571 = vld [vmem:[%s507 + $0xf8] sm:$0xff]
                  %572 = vst [vmem:[%s508 + $0xf8] sm:$0xff] %v571
                  %s573 = sadd.s32 1, %s506
                  %p574 = scmp.ge.s32.totalorder %s573, %s499
                  %s575 = scalar_select %p574, 0, %s573
                  %s576 = smul.u32 %s575, 256
                  %s577 = smul.u32 %s575, 256
                  %s578 = scalar_lea.vmem %s343, %s576 [#allocation2]
                  %s579 = scalar_lea.vmem %s354, %s577
                $region78: #{simple_similarity_forward.1} parent=72 // loop_footer
                  %s503 = sadd.s32 %s501, 1
                $region79: #{simple_similarity_forward.1} parent=72 // loop_footer_branch
                  %500 = sbr.rel target = $region75
                $region80: #{simple_similarity_forward.1} parent=72 // loop_exit
                  _
                %s580 = sshrl.u32 %s498, 5
                %s581 = sand.u32 %s498, 31
                %s582 = smul.u32 %s580, 32
                %s583 = smul.u32 8, %s582
                %s584 = scalar_lea.vmem %s343, %s583 [#allocation2]
                %s585 = smul.u32 8, %s582
                %s586 = scalar_lea.vmem %s354, %s585
                // While loop
                $region81: #{simple_similarity_forward.1} parent=72 // loop_pre_header
                  _
                $region82: #{simple_similarity_forward.1} parent=72 // loop_header
                  %s588 = sphi 0, %s590
                  %p589 = scmp.ge.s32.totalorder %s588, %s581
                  %s593 = sphi 0, %s600
                  %s594 = sphi %s584, %s603
                  %s595 = sphi %s586, %s604
                $region83: #{simple_similarity_forward.1} parent=72 // loop_header_branch
                  %592 = sbr.rel (%p589) target = $region87
                $region84: #{simple_similarity_forward.1} parent=72 // loop_body
                  %v596 = vld [vmem:[%s594] sm:$0xff]
                  %597 = vst [vmem:[%s595] sm:$0xff] %v596
                  %s598 = sadd.s32 1, %s593
                  %p599 = scmp.ge.s32.totalorder %s598, %s581
                  %s600 = scalar_select %p599, 0, %s598
                  %s601 = smul.u32 %s600, 8
                  %s602 = smul.u32 %s600, 8
                  %s603 = scalar_lea.vmem %s584, %s601 [#allocation2]
                  %s604 = scalar_lea.vmem %s586, %s602
                $region85: #{simple_similarity_forward.1} parent=72 // loop_footer
                  %s590 = sadd.s32 %s588, 1
                $region86: #{simple_similarity_forward.1} parent=72 // loop_footer_branch
                  %587 = sbr.rel target = $region82
                $region87: #{simple_similarity_forward.1} parent=72 // loop_exit
                  _
                %s605 = sshll.u32 1, %s493
                %s606 = ssub.s32 %s605, 1
                loop: start=0, step=1, limit=1
                $region88: #{simple_similarity_forward.1} parent=72 // loop_pre_header
                  _
                $region89: #{simple_similarity_forward.1} parent=72 // loop_header
                  %s608 = sphi 0, %s612
                  %p609 = scmp.ge.s32.totalorder %s608, 1
                  %s613 = sphi %s495, %s495
                  %s614 = sphi %s497, %s497
                $region90: #{simple_similarity_forward.1} parent=72 // loop_header_branch
                  %611 = sbr.rel (%p609) target = $region94
                $region91: #{simple_similarity_forward.1} parent=72 // loop_body
                  %v615 = vld [vmem:[%s613] sm:%s606]
                  %616 = vst [vmem:[%s614] sm:%s606] %v615
                $region92: #{simple_similarity_forward.1} parent=72 // loop_footer
                  %s612 = sadd.s32 1, %s608
                $region93: #{simple_similarity_forward.1} parent=72 // loop_footer_branch
                  %607 = sbr.rel target = $region89
                $region94: #{simple_similarity_forward.1} parent=72 // loop_exit
                  _
              $region73: #{simple_similarity_forward.1} parent=39 // pred_fallthru
                _
            $region40: #{simple_similarity_forward.1} parent=35 // pred_fallthru
              _
            // Predicated region
            $region41: #{simple_similarity_forward.1} parent=35 // pred_check
              %p363 = pneg %p359
            $region42: #{simple_similarity_forward.1} parent=35 // pred_check_branch
              %365 = sbr.rel (%p363) target = $region44
            $region43: #{simple_similarity_forward.1} parent=35 // pred_region
              %s366 = sshll.u32 1, %s355
              %s367 = ssub.s32 %s366, 1
              loop: start=0, step=1, limit=1
              $region45: #{simple_similarity_forward.1} parent=43 // loop_pre_header
                _
              $region46: #{simple_similarity_forward.1} parent=43 // loop_header
                %s369 = sphi 0, %s373
                %p370 = scmp.ge.s32.totalorder %s369, 1
                %s374 = sphi %s343, %s343
                %s375 = sphi %s354, %s354
              $region47: #{simple_similarity_forward.1} parent=43 // loop_header_branch
                %372 = sbr.rel (%p370) target = $region51
              $region48: #{simple_similarity_forward.1} parent=43 // loop_body
                %v376 = vld [vmem:[%s374] sm:%s367]
                %377 = vst [vmem:[%s375] sm:%s367] %v376
              $region49: #{simple_similarity_forward.1} parent=43 // loop_footer
                %s373 = sadd.s32 1, %s369
              $region50: #{simple_similarity_forward.1} parent=43 // loop_footer_branch
                %368 = sbr.rel target = $region46
              $region51: #{simple_similarity_forward.1} parent=43 // loop_exit
                _
            $region44: #{simple_similarity_forward.1} parent=35 // pred_fallthru
              _
          $region36: #{simple_similarity_forward.1} parent=31 // pred_fallthru
            _
          %617 = vnop
        $region32: #{simple_similarity_forward.1} parent=27 // pred_fallthru
          _
      $region28: #{simple_similarity_forward.1} parent=5 // pred_fallthru
        _
      %p618 = scmp.le.s32.totalorder 2, %s8
      // Predicated region
      $region95: #{simple_similarity_forward.1} parent=5 // pred_check
        %p619 = pneg %p618
      $region96: #{simple_similarity_forward.1} parent=5 // pred_check_branch
        %621 = sbr.rel (%p619) target = $region98
      $region97: #{simple_similarity_forward.1} parent=5 // pred_region
        %s622 = ssub.s32 %s8, 2
        // Predicated region
        $region99: #{simple_similarity_forward.1} parent=97 // pred_check
          %p623 = pneg %p84
        $region100: #{simple_similarity_forward.1} parent=97 // pred_check_branch
          %625 = sbr.rel (%p623) target = $region102
        $region101: #{simple_similarity_forward.1} parent=97 // pred_region
          %s626 = sand.u32 %s69, 1
          %s627 = sand.u32 %s69, 1
          %s628 = smul.addr %s627, 16
          %s629 = scalar_lea.vmem [#allocation2], %s628
        $region102: #{simple_similarity_forward.1} parent=97 // pred_fallthru
          _
      $region98: #{simple_similarity_forward.1} parent=5 // pred_fallthru
        _
    $region6: #{simple_similarity_forward.1} parent=1 // loop_footer
      %s12 = sadd.s32 1, %s8
    $region7: #{simple_similarity_forward.1} parent=1 // loop_footer_branch
      %7 = sbr.rel target = $region3
    $region8: #{simple_similarity_forward.1} parent=1 // loop_exit
      _

</llo_original>
